<compile_context>
chip_gen: v7x
topology: tpu7x:2x2x1
jax: 0.10.0
libtpu: 0.0.40
codegen_flags: <defaults>
</compile_context>

<pallas_src>
import functools

import jax
import jax.numpy as jnp
from jax import lax
from jax.experimental import pallas as pl
from jax.experimental.pallas import tpu as pltpu

EMBEDDING_SIZE = 50
HIDDEN_SIZE = 128
NUM_FEATURES = 2
CATEGORICAL_COLS = ["Agencia_ID", "Canal_ID", "Ruta_SAK", "Cliente_ID", "Producto_ID"]


def _round_up(x, m):
    return (x + m - 1) // m * m


def _choose_tile(B, block_rows):
    """Pick the batch tile.

    Multi-tile sizes must be a multiple of 128 so the lane-dense (1, bt)
    output block satisfies the (8, 128) constraint; when the batch is big
    enough we force >= 2 tiles so megacore (v7x) can shard them.
    """
    if B <= 128:
        bt = _round_up(max(B, 1), 8)            # single tile, block == full array
    else:
        half = _round_up(pl.cdiv(B, 2), 128)    # guarantees >= 2 tiles
        bt = min(_round_up(block_rows, 128), half)
    B_pad = _round_up(B, bt)
    return bt, B_pad


def mlp_kernel(packed_ref,
               wnum_ref, bnum_ref,
               folded_ref, w1n_ref, b1_ref,
               w2_ref, b2_ref,
               w3_ref, b3_ref,
               out_ref, *, n_cat, n_num):
    bt = packed_ref.shape[0]
    v_pad = folded_ref.shape[0]
    cdt = folded_ref.dtype

    packed = packed_ref[...]                                   # (bt, 8) int32
    idx = packed[:, :n_cat]                                    # (bt, 5) int32
    xnum = pltpu.bitcast(packed[:, n_cat:n_cat + n_num],
                         jnp.float32)                          # (bt, 2) f32

    # ---- fused embedding gather: multi-hot over the concatenated vocab ----
    # Indices were pre-shifted by per-column offsets, so the 5 one-hots are
    # disjoint and their OR is the exact {0,1} multi-hot.  Stay in int/bool
    # until a single final cast (v5e-friendly, cheapest on the big buffer).
    iota = lax.broadcasted_iota(jnp.int32, (bt, v_pad), 1)
    hit = idx[:, 0:1] == iota
    for c in range(1, n_cat):                                  # static loop
        hit = hit | (idx[:, c:c + 1] == iota)
    mh = hit.astype(cdt)                                       # (bt, v_pad)

    # fc1, categorical part:  sum_c emb_c[idx_c] @ W1_c  ==  mh @ folded_table
    h1 = jnp.dot(mh, folded_ref[...],
                 preferred_element_type=jnp.float32)           # (bt, H) f32

    # num_layer (Linear(2, 50) + relu) as VPU broadcast FMAs (K=2 -> no MXU),
    # kept in f32 (no bf16 element-wise ops; v5e VPU has no bf16 VALU).
    hn = bnum_ref[...]                                         # (1, 50) -> bcast
    for f in range(n_num):
        hn = hn + xnum[:, f:f + 1] * wnum_ref[f:f + 1, :]
    hn = jnp.maximum(hn, 0.0)                                  # (bt, 50)

    # fc1, numeric part + bias + relu.
    h1 = h1 + jnp.dot(hn.astype(cdt), w1n_ref[...],
                      preferred_element_type=jnp.float32) + b1_ref[...]
    h1 = jnp.maximum(h1, 0.0)

    # fc2 + relu.
    h2 = jnp.dot(h1.astype(cdt), w2_ref[...],
                 preferred_element_type=jnp.float32) + b2_ref[...]
    h2 = jnp.maximum(h2, 0.0)                                  # (bt, H)

    # fc3: contract the lane dim of h2 against w3 (stored as a (1, H) row),
    # producing a lane-dense (1, bt) row -> unmasked, lane-dense store.
    # Operands in compute_dtype, f32 accumulation.
    row = lax.dot_general(w3_ref[...], h2.astype(cdt),
                          dimension_numbers=(((1,), (1,)), ((), ())),
                          preferred_element_type=jnp.float32)  # (1, bt)
    out_ref[...] = row + b3_ref[0]


def init_params(key, num_unique_vals, hidden_size=HIDDEN_SIZE,
                num_features=NUM_FEATURES):
    """Deterministic synthetic parameters matching SimpleModel.__init__ shapes."""
    n_cat = len(CATEGORICAL_COLS)
    keys = jax.random.split(key, n_cat + 8)
    scale = 0.1
    params = {}
    params["emb"] = [
        scale * jax.random.normal(keys[i],
                                  (num_unique_vals[col], EMBEDDING_SIZE),
                                  dtype=jnp.float32)
        for i, col in enumerate(CATEGORICAL_COLS)
    ]
    k = n_cat
    # Stored already transposed: (in, out); biases as (1, out) for broadcast.
    params["w_num"] = scale * jax.random.normal(keys[k + 0], (num_features, EMBEDDING_SIZE), jnp.float32)
    params["b_num"] = scale * jax.random.normal(keys[k + 1], (1, EMBEDDING_SIZE), jnp.float32)
    in1 = EMBEDDING_SIZE * n_cat + EMBEDDING_SIZE  # 300
    params["w1"] = scale * jax.random.normal(keys[k + 2], (in1, hidden_size), jnp.float32)
    params["b1"] = scale * jax.random.normal(keys[k + 3], (1, hidden_size), jnp.float32)
    params["w2"] = scale * jax.random.normal(keys[k + 4], (hidden_size, hidden_size), jnp.float32)
    params["b2"] = scale * jax.random.normal(keys[k + 5], (1, hidden_size), jnp.float32)
    params["w3"] = scale * jax.random.normal(keys[k + 6], (hidden_size, 1), jnp.float32)
    params["b3"] = scale * jax.random.normal(keys[k + 7], (1, 1), jnp.float32)
    return params


def simple_model_forward(x_cat, x_num, params, *,
                         compute_dtype=jnp.bfloat16, block_rows=1024):
    """x_cat: (5, B) int32 indices, x_num: (B, num_features) float -> (B,) f32."""
    n_cat = len(params["emb"])
    n_num = params["w_num"].shape[0]
    hidden = params["w1"].shape[1]
    B = x_num.shape[0]

    # ---- one-time weight transform (exact reassociation of fc1) ----------
    # concat_c(emb_c[i_c]) @ W1_cat  ==  sum_c emb_c[i_c] @ W1_c, so fold each
    # table through its W1 slice once; the kernel then only needs indices.
    # Note: quantizing the folded product to bf16 once gives slightly larger
    # error than quantizing emb and W1 separately; covered by 1e-2 tolerance.
    sizes = [int(t.shape[0]) for t in params["emb"]]
    offs, acc = [], 0
    for s in sizes:
        offs.append(acc)
        acc += s
    v_total = acc
    v_pad = _round_up(v_total, 128)
    folded = jnp.concatenate(
        [params["emb"][c] @ params["w1"][c * EMBEDDING_SIZE:(c + 1) * EMBEDDING_SIZE, :]
         for c in range(n_cat)], axis=0)                       # (v_total, H) f32
    folded_tbl = jnp.zeros((v_pad, hidden), jnp.float32).at[:v_total].set(folded)
    folded_tbl = folded_tbl.astype(compute_dtype)

    w1n = params["w1"][n_cat * EMBEDDING_SIZE:, :].astype(compute_dtype)  # (50, H)
    w2 = params["w2"].astype(compute_dtype)                               # (H, H)
    w3r = params["w3"].T.astype(compute_dtype)                            # (1, H)
    b3 = params["b3"].reshape(1).astype(jnp.float32)                      # (1,) SMEM

    # ---- batch tiling ------------------------------------------------------
    bt, B_pad = _choose_tile(B, block_rows)
    grid = (B_pad // bt,)

    # Clamp indices into range (matches JAX gather clamp semantics), shift
    # into the concatenated vocabulary, and pack [idx(5) | bitcast(x_num)(2)]
    # into ONE int32 array so each tile is a single (bt, 8) block.
    sizes_arr = jnp.array(sizes, dtype=jnp.int32)[:, None]                # (5, 1)
    offs_arr = jnp.array(offs, dtype=jnp.int32)[:, None]                  # (5, 1)
    idx = (jnp.clip(x_cat.astype(jnp.int32), 0, sizes_arr - 1) + offs_arr).T  # (B, 5)
    xnum_bits = lax.bitcast_convert_type(x_num.astype(jnp.float32), jnp.int32)  # (B, 2)
    pack_w = _round_up(n_cat + n_num, 8)
    packed = jnp.concatenate(
        [idx, xnum_bits,
         jnp.zeros((B, pack_w - n_cat - n_num), jnp.int32)], axis=1)      # (B, 8)
    if B_pad != B:
        packed = jnp.pad(packed, ((0, B_pad - B), (0, 0)))

    row_map = lambda i: (i, 0)     # batch-tiled operand
    const_map = lambda i: (0, 0)   # weights: DMA'd once, VMEM-resident

    kernel = functools.partial(mlp_kernel, n_cat=n_cat, n_num=n_num)

    out = pl.pallas_call(
        kernel,
        out_shape=jax.ShapeDtypeStruct((1, B_pad), jnp.float32),
        grid=grid,
        in_specs=[
            pl.BlockSpec((bt, pack_w), row_map),                # packed idx+num
            pl.BlockSpec(params["w_num"].shape, const_map),     # w_num (2, 50)
            pl.BlockSpec(params["b_num"].shape, const_map),     # b_num (1, 50)
            pl.BlockSpec(folded_tbl.shape, const_map),          # folded (v_pad, H)
            pl.BlockSpec(w1n.shape, const_map),                 # W1_num (50, H)
            pl.BlockSpec(params["b1"].shape, const_map),        # b1 (1, H)
            pl.BlockSpec(w2.shape, const_map),                  # W2 (H, H)
            pl.BlockSpec(params["b2"].shape, const_map),        # b2 (1, H)
            pl.BlockSpec(w3r.shape, const_map),                 # w3 row (1, H)
            pl.BlockSpec(memory_space=pltpu.MemorySpace.SMEM),  # b3 scalar
        ],
        out_specs=pl.BlockSpec((1, bt), lambda i: (0, i)),      # lane-dense rows
        compiler_params=pltpu.CompilerParams(
            dimension_semantics=("parallel",)),
    )(packed, params["w_num"], params["b_num"], folded_tbl, w1n,
      params["b1"], w2, params["b2"], w3r, b3)
    return out[0, :B]


def reference_forward(x_cat, x_num, params):
    """Pure-JAX f32 reference mirroring the PyTorch forward."""
    emb_outs = [params["emb"][i][jnp.clip(x_cat[i], 0)]
                for i in range(len(CATEGORICAL_COLS))]
    x_cat_emb = jnp.concatenate(emb_outs, axis=-1)
    h_num = jax.nn.relu(x_num @ params["w_num"] + params["b_num"])
    x = jnp.concatenate([x_cat_emb, h_num], axis=-1)
    h1 = jax.nn.relu(x @ params["w1"] + params["b1"])
    h2 = jax.nn.relu(h1 @ params["w2"] + params["b2"])
    return (h2 @ params["w3"] + params["b3"])[:, 0]


def _make_inputs(key, num_unique_vals, B):
    k_cat, k_num = jax.random.split(key, 2)
    maxes = jnp.array([num_unique_vals[c] for c in CATEGORICAL_COLS],
                      dtype=jnp.int32)[:, None]
    x_cat = (jax.random.randint(k_cat, (len(CATEGORICAL_COLS), B), -2, 100)
             % maxes).astype(jnp.int32)
    x_cat = x_cat.at[0, 0].set(-1)   # exercise the clip(0) semantics
    x_num = jax.random.normal(k_num, (B, NUM_FEATURES), dtype=jnp.float32)
    return x_cat, x_num


if __name__ == "__main__":
    key = jax.random.PRNGKey(0)
    num_unique_vals = {
        "Agencia_ID": 30, "Canal_ID": 10, "Ruta_SAK": 20,
        "Cliente_ID": 40, "Producto_ID": 25,
    }
    params = init_params(key, num_unique_vals)

    # --- small batch: exact f32 check + bf16 (perf-mode) check -------------
    x_cat, x_num = _make_inputs(jax.random.PRNGKey(0), num_unique_vals, B=8)
    ref = reference_forward(x_cat, x_num, params)

    out_f32 = jax.block_until_ready(
        simple_model_forward(x_cat, x_num, params, compute_dtype=jnp.float32))
    assert out_f32.shape == (8,)
    assert jnp.allclose(out_f32, ref, atol=1e-4, rtol=1e-4)

    out_bf16 = jax.block_until_ready(
        simple_model_forward(x_cat, x_num, params, compute_dtype=jnp.bfloat16))
    assert jnp.allclose(out_bf16, ref, atol=1e-2, rtol=1e-2)

    # --- larger batch, explicit small tile: 3 grid steps + row padding ------
    x_cat2, x_num2 = _make_inputs(jax.random.PRNGKey(1), num_unique_vals, B=300)
    ref2 = reference_forward(x_cat2, x_num2, params)
    out2 = jax.block_until_ready(
        simple_model_forward(x_cat2, x_num2, params,
                             compute_dtype=jnp.bfloat16, block_rows=128))
    assert out2.shape == (300,)
    assert jnp.allclose(out2, ref2, atol=1e-2, rtol=1e-2)

    # --- larger batch, default tile: exercises the >=2-tile megacore split --
    out3 = jax.block_until_ready(
        simple_model_forward(x_cat2, x_num2, params, compute_dtype=jnp.bfloat16))
    assert out3.shape == (300,)
    assert jnp.allclose(out3, ref2, atol=1e-2, rtol=1e-2)

    print("KERNEL_OK")
</pallas_src>

<mosaic_0001>
module attributes {stable_mosaic.version = 11 : i64} {
  func.func @mlp_kernel(%arg0: i32, %arg1: memref<8x8xi32, #tpu.memory_space<vmem>>, %arg2: memref<2x50xf32, #tpu.memory_space<vmem>>, %arg3: memref<1x50xf32, #tpu.memory_space<vmem>>, %arg4: memref<128x128xf32, #tpu.memory_space<vmem>>, %arg5: memref<50x128xf32, #tpu.memory_space<vmem>>, %arg6: memref<1x128xf32, #tpu.memory_space<vmem>>, %arg7: memref<128x128xf32, #tpu.memory_space<vmem>>, %arg8: memref<1x128xf32, #tpu.memory_space<vmem>>, %arg9: memref<1x128xf32, #tpu.memory_space<vmem>>, %arg10: memref<1xf32, #tpu.memory_space<smem>>, %arg11: memref<1x8xf32, #tpu.memory_space<vmem>>) attributes {dimension_semantics = [#tpu.dimension_semantics<parallel>], iteration_bounds = array<i64: 1>, scalar_prefetch = 0 : i64, scratch_operands = 0 : i64, tpu.core_type = #tpu.core_type<tc>, window_params = [{transform_indices = @transform_0, window_bounds = array<i64: 8, 8>}, {pipeline_mode = #tpu.pipeline_mode<synchronous>, transform_indices = @transform_1, window_bounds = array<i64: 2, 50>}, {pipeline_mode = #tpu.pipeline_mode<synchronous>, transform_indices = @transform_2, window_bounds = array<i64: 1, 50>}, {pipeline_mode = #tpu.pipeline_mode<synchronous>, transform_indices = @transform_3, window_bounds = array<i64: 128, 128>}, {pipeline_mode = #tpu.pipeline_mode<synchronous>, transform_indices = @transform_4, window_bounds = array<i64: 50, 128>}, {pipeline_mode = #tpu.pipeline_mode<synchronous>, transform_indices = @transform_5, window_bounds = array<i64: 1, 128>}, {pipeline_mode = #tpu.pipeline_mode<synchronous>, transform_indices = @transform_6, window_bounds = array<i64: 128, 128>}, {pipeline_mode = #tpu.pipeline_mode<synchronous>, transform_indices = @transform_7, window_bounds = array<i64: 1, 128>}, {pipeline_mode = #tpu.pipeline_mode<synchronous>, transform_indices = @transform_8, window_bounds = array<i64: 1, 128>}, {transform_indices = @transform_9, window_bounds = array<i64: 1>}, {transform_indices = @transform_10, window_bounds = array<i64: 1, 8>}]} {
    %c0 = arith.constant 0 : index
    %c0_0 = arith.constant 0 : index
    %0 = vector.load %arg1[%c0, %c0_0] : memref<8x8xi32, #tpu.memory_space<vmem>>, vector<8x8xi32>
    %1 = vector.extract_strided_slice %0 {offsets = [0, 0], sizes = [8, 5], strides = [1, 1]} : vector<8x8xi32> to vector<8x5xi32>
    %2 = vector.extract_strided_slice %0 {offsets = [0, 5], sizes = [8, 2], strides = [1, 1]} : vector<8x8xi32> to vector<8x2xi32>
    %3 = tpu.bitcast %2 : vector<8x2xi32> -> vector<8x2xf32>
    %4 = tpu.iota {dimensions = array<i32: 1>} : vector<8x128xi32>
    %5 = vector.extract_strided_slice %1 {offsets = [0, 0], sizes = [8, 1], strides = [1, 1]} : vector<8x5xi32> to vector<8x1xi32>
    %6 = vector.broadcast %5 : vector<8x1xi32> to vector<8x128xi32>
    %7 = arith.cmpi eq, %6, %4 : vector<8x128xi32>
    %8 = vector.extract_strided_slice %1 {offsets = [0, 1], sizes = [8, 1], strides = [1, 1]} : vector<8x5xi32> to vector<8x1xi32>
    %9 = vector.broadcast %8 : vector<8x1xi32> to vector<8x128xi32>
    %10 = arith.cmpi eq, %9, %4 : vector<8x128xi32>
    %11 = arith.ori %7, %10 : vector<8x128xi1>
    %12 = vector.extract_strided_slice %1 {offsets = [0, 2], sizes = [8, 1], strides = [1, 1]} : vector<8x5xi32> to vector<8x1xi32>
    %13 = vector.broadcast %12 : vector<8x1xi32> to vector<8x128xi32>
    %14 = arith.cmpi eq, %13, %4 : vector<8x128xi32>
    %15 = arith.ori %11, %14 : vector<8x128xi1>
    %16 = vector.extract_strided_slice %1 {offsets = [0, 3], sizes = [8, 1], strides = [1, 1]} : vector<8x5xi32> to vector<8x1xi32>
    %17 = vector.broadcast %16 : vector<8x1xi32> to vector<8x128xi32>
    %18 = arith.cmpi eq, %17, %4 : vector<8x128xi32>
    %19 = arith.ori %15, %18 : vector<8x128xi1>
    %20 = vector.extract_strided_slice %1 {offsets = [0, 4], sizes = [8, 1], strides = [1, 1]} : vector<8x5xi32> to vector<8x1xi32>
    %21 = vector.broadcast %20 : vector<8x1xi32> to vector<8x128xi32>
    %22 = arith.cmpi eq, %21, %4 : vector<8x128xi32>
    %23 = arith.ori %19, %22 : vector<8x128xi1>
    %24 = arith.extui %23 : vector<8x128xi1> to vector<8x128xi32>
    %25 = arith.sitofp %24 : vector<8x128xi32> to vector<8x128xf32>
    %c0_1 = arith.constant 0 : index
    %c0_2 = arith.constant 0 : index
    %26 = vector.load %arg4[%c0_1, %c0_2] : memref<128x128xf32, #tpu.memory_space<vmem>>, vector<128x128xf32>
    %cst = arith.constant dense<0.000000e+00> : vector<8x128xf32>
    %27 = tpu.matmul %25, %26, %cst {dimension_numbers = #tpu.dot_dimension_numbers<[1], [0], [0], [1], [0, 0, 1, 1], [], []>} : vector<8x128xf32>, vector<128x128xf32>, vector<8x128xf32> -> vector<8x128xf32>
    %c0_3 = arith.constant 0 : index
    %c0_4 = arith.constant 0 : index
    %28 = vector.load %arg3[%c0_3, %c0_4] : memref<1x50xf32, #tpu.memory_space<vmem>>, vector<1x50xf32>
    %29 = vector.extract_strided_slice %3 {offsets = [0, 0], sizes = [8, 1], strides = [1, 1]} : vector<8x2xf32> to vector<8x1xf32>
    %c0_5 = arith.constant 0 : index
    %c0_6 = arith.constant 0 : index
    %30 = vector.load %arg2[%c0_5, %c0_6] : memref<2x50xf32, #tpu.memory_space<vmem>>, vector<1x50xf32>
    %31 = vector.broadcast %29 : vector<8x1xf32> to vector<8x50xf32>
    %32 = vector.broadcast %30 : vector<1x50xf32> to vector<8x50xf32>
    %33 = arith.mulf %31, %32 : vector<8x50xf32>
    %34 = vector.broadcast %28 : vector<1x50xf32> to vector<8x50xf32>
    %35 = arith.addf %34, %33 : vector<8x50xf32>
    %36 = vector.extract_strided_slice %3 {offsets = [0, 1], sizes = [8, 1], strides = [1, 1]} : vector<8x2xf32> to vector<8x1xf32>
    %c1 = arith.constant 1 : index
    %c0_7 = arith.constant 0 : index
    %37 = vector.load %arg2[%c1, %c0_7] : memref<2x50xf32, #tpu.memory_space<vmem>>, vector<1x50xf32>
    %38 = vector.broadcast %36 : vector<8x1xf32> to vector<8x50xf32>
    %39 = vector.broadcast %37 : vector<1x50xf32> to vector<8x50xf32>
    %40 = arith.mulf %38, %39 : vector<8x50xf32>
    %41 = arith.addf %35, %40 : vector<8x50xf32>
    %cst_8 = arith.constant 0.000000e+00 : f32
    %42 = vector.broadcast %cst_8 : f32 to vector<8x50xf32>
    %43 = arith.maximumf %41, %42 : vector<8x50xf32>
    %c0_9 = arith.constant 0 : index
    %c0_10 = arith.constant 0 : index
    %44 = vector.load %arg5[%c0_9, %c0_10] : memref<50x128xf32, #tpu.memory_space<vmem>>, vector<50x128xf32>
    %cst_11 = arith.constant dense<0.000000e+00> : vector<8x128xf32>
    %45 = tpu.matmul %43, %44, %cst_11 {dimension_numbers = #tpu.dot_dimension_numbers<[1], [0], [0], [1], [0, 0, 1, 1], [], []>} : vector<8x50xf32>, vector<50x128xf32>, vector<8x128xf32> -> vector<8x128xf32>
    %46 = arith.addf %27, %45 : vector<8x128xf32>
    %c0_12 = arith.constant 0 : index
    %c0_13 = arith.constant 0 : index
    %47 = vector.load %arg6[%c0_12, %c0_13] : memref<1x128xf32, #tpu.memory_space<vmem>>, vector<1x128xf32>
    %48 = vector.broadcast %47 : vector<1x128xf32> to vector<8x128xf32>
    %49 = arith.addf %46, %48 : vector<8x128xf32>
    %cst_14 = arith.constant 0.000000e+00 : f32
    %50 = vector.broadcast %cst_14 : f32 to vector<8x128xf32>
    %51 = arith.maximumf %49, %50 : vector<8x128xf32>
    %c0_15 = arith.constant 0 : index
    %c0_16 = arith.constant 0 : index
    %52 = vector.load %arg7[%c0_15, %c0_16] : memref<128x128xf32, #tpu.memory_space<vmem>>, vector<128x128xf32>
    %cst_17 = arith.constant dense<0.000000e+00> : vector<8x128xf32>
    %53 = tpu.matmul %51, %52, %cst_17 {dimension_numbers = #tpu.dot_dimension_numbers<[1], [0], [0], [1], [0, 0, 1, 1], [], []>} : vector<8x128xf32>, vector<128x128xf32>, vector<8x128xf32> -> vector<8x128xf32>
    %c0_18 = arith.constant 0 : index
    %c0_19 = arith.constant 0 : index
    %54 = vector.load %arg8[%c0_18, %c0_19] : memref<1x128xf32, #tpu.memory_space<vmem>>, vector<1x128xf32>
    %55 = vector.broadcast %54 : vector<1x128xf32> to vector<8x128xf32>
    %56 = arith.addf %53, %55 : vector<8x128xf32>
    %cst_20 = arith.constant 0.000000e+00 : f32
    %57 = vector.broadcast %cst_20 : f32 to vector<8x128xf32>
    %58 = arith.maximumf %56, %57 : vector<8x128xf32>
    %c0_21 = arith.constant 0 : index
    %c0_22 = arith.constant 0 : index
    %59 = vector.load %arg9[%c0_21, %c0_22] : memref<1x128xf32, #tpu.memory_space<vmem>>, vector<1x128xf32>
    %cst_23 = arith.constant dense<0.000000e+00> : vector<1x8xf32>
    %60 = tpu.matmul %59, %58, %cst_23 {dimension_numbers = #tpu.dot_dimension_numbers<[1], [1], [0], [0], [0, 0, 1, 0], [], []>} : vector<1x128xf32>, vector<8x128xf32>, vector<1x8xf32> -> vector<1x8xf32>
    %c0_24 = arith.constant 0 : index
    %61 = memref.load %arg10[%c0_24] : memref<1xf32, #tpu.memory_space<smem>>
    %62 = vector.broadcast %61 : f32 to vector<1x8xf32>
    %63 = arith.addf %60, %62 : vector<1x8xf32>
    %c0_25 = arith.constant 0 : index
    %c0_26 = arith.constant 0 : index
    %64 = vector.load %arg11[%c0_25, %c0_26] : memref<1x8xf32, #tpu.memory_space<vmem>>, vector<1x8xf32>
    tpu.vector_store %arg11[%c0_25, %c0_26], %63 {strides = array<i32>} : memref<1x8xf32, #tpu.memory_space<vmem>>, vector<1x8xf32>,
    return
  }
  func.func @transform_0(%arg0: i32) -> (i32, i32) {
    %c0_i32 = arith.constant 0 : i32
    %c0_i32_0 = arith.constant 0 : i32
    return %arg0, %c0_i32 : i32, i32
  }
  func.func @transform_1(%arg0: i32) -> (i32, i32) {
    %c0_i32 = arith.constant 0 : i32
    %c0_i32_0 = arith.constant 0 : i32
    %c0_i32_1 = arith.constant 0 : i32
    return %c0_i32, %c0_i32_0 : i32, i32
  }
  func.func @transform_2(%arg0: i32) -> (i32, i32) {
    %c0_i32 = arith.constant 0 : i32
    %c0_i32_0 = arith.constant 0 : i32
    %c0_i32_1 = arith.constant 0 : i32
    return %c0_i32, %c0_i32_0 : i32, i32
  }
  func.func @transform_3(%arg0: i32) -> (i32, i32) {
    %c0_i32 = arith.constant 0 : i32
    %c0_i32_0 = arith.constant 0 : i32
    %c0_i32_1 = arith.constant 0 : i32
    return %c0_i32, %c0_i32_0 : i32, i32
  }
  func.func @transform_4(%arg0: i32) -> (i32, i32) {
    %c0_i32 = arith.constant 0 : i32
    %c0_i32_0 = arith.constant 0 : i32
    %c0_i32_1 = arith.constant 0 : i32
    return %c0_i32, %c0_i32_0 : i32, i32
  }
  func.func @transform_5(%arg0: i32) -> (i32, i32) {
    %c0_i32 = arith.constant 0 : i32
    %c0_i32_0 = arith.constant 0 : i32
    %c0_i32_1 = arith.constant 0 : i32
    return %c0_i32, %c0_i32_0 : i32, i32
  }
  func.func @transform_6(%arg0: i32) -> (i32, i32) {
    %c0_i32 = arith.constant 0 : i32
    %c0_i32_0 = arith.constant 0 : i32
    %c0_i32_1 = arith.constant 0 : i32
    return %c0_i32, %c0_i32_0 : i32, i32
  }
  func.func @transform_7(%arg0: i32) -> (i32, i32) {
    %c0_i32 = arith.constant 0 : i32
    %c0_i32_0 = arith.constant 0 : i32
    %c0_i32_1 = arith.constant 0 : i32
    return %c0_i32, %c0_i32_0 : i32, i32
  }
  func.func @transform_8(%arg0: i32) -> (i32, i32) {
    %c0_i32 = arith.constant 0 : i32
    %c0_i32_0 = arith.constant 0 : i32
    %c0_i32_1 = arith.constant 0 : i32
    return %c0_i32, %c0_i32_0 : i32, i32
  }
  func.func @transform_9(%arg0: i32) -> i32 {
    %c0_i32 = arith.constant 0 : i32
    %c0_i32_0 = arith.constant 0 : i32
    return %c0_i32 : i32
  }
  func.func @transform_10(%arg0: i32) -> (i32, i32) {
    %c0_i32 = arith.constant 0 : i32
    %c0_i32_0 = arith.constant 0 : i32
    return %c0_i32, %arg0 : i32, i32
  }
}

</mosaic_0001>

<llo_original>
// kernel: tpu_custom_call.1
$region0: #{tpu_custom_call.1}
  #allocation0 [shape = 'u32[]', space=smem, size = 0x4, offset = 0x4, fixed_abs, tag = 'smem constant byte address 0x4 - core index']
  #allocation1 [shape = 'u32[144,128]{1,0:T(1,128)}', space=vmem, size = 0x12000, scoped, tag = 'internal scratch']
  #allocation2 [shape = 'f32[1]{0:T(128)S(6)}', space=smem, size = 0x200, scoped, tag = 'scoped memory for tpu_custom_call.1']
  %s0 = inlined_call_operand.hbm [shape: s32[8,8], index: 0, kind: input, shape index: {}]
  %s1 = inlined_call_operand.vmem [shape: f32[2,50], index: 1, kind: input, shape index: {}]
  %s2 = inlined_call_operand.vmem [shape: f32[1,50], index: 2, kind: input, shape index: {}]
  %s3 = inlined_call_operand.hbm [shape: f32[128,128], index: 3, kind: input, shape index: {}]
  %s4 = inlined_call_operand.hbm [shape: f32[50,128], index: 4, kind: input, shape index: {}]
  %s5 = inlined_call_operand.vmem [shape: f32[1,128], index: 5, kind: input, shape index: {}]
  %s6 = inlined_call_operand.hbm [shape: f32[128,128], index: 6, kind: input, shape index: {}]
  %s7 = inlined_call_operand.vmem [shape: f32[1,128], index: 7, kind: input, shape index: {}]
  %s8 = inlined_call_operand.vmem [shape: f32[1,128], index: 8, kind: input, shape index: {}]
  %s9 = inlined_call_operand.<no memory space> [shape: f32[1], index: 9, kind: input, shape index: {}]
  %s10 = inlined_call_operand.hbm [shape: f32[1,8], index: 10, kind: output, shape index: {}]
  %s11 = sld [smem:[#allocation0]]
  $region66: #{tpu_custom_call.1} parent=0
    _
  %s13 = ssub.s32 1, %s11
  %s14 = scalar_select 0, %s13, %s11
  %15 = sst [smem:[#allocation2]] %s9
  $region1: #{tpu_custom_call.1} parent=0
    #allocation3 [shape = 'u8[4096]{0}', space=vmem, size = 0x1000, scoped, tag = 'input window, operand 0, single buffered']
    #allocation4 [shape = 's32[1]{0}', space=sflag, size = 0x4, scoped, tag = 'scoped memory for tpu_custom_call.1']
    #allocation5 [shape = 's32[1]{0}', space=sflag, size = 0x4, scoped, tag = 'scoped memory for tpu_custom_call.1']
    #allocation6 [shape = 'u8[65536]{0}', space=vmem, size = 0x10000, scoped, tag = 'input window, operand 3, single buffered']
    #allocation7 [shape = 's32[1]{0}', space=sflag, size = 0x4, scoped, tag = 'scoped memory for tpu_custom_call.1']
    #allocation8 [shape = 'u8[28672]{0}', space=vmem, size = 0x7000, scoped, tag = 'input window, operand 4, single buffered']
    #allocation9 [shape = 'u8[65536]{0}', space=vmem, size = 0x10000, scoped, tag = 'input window, operand 6, single buffered']
    #allocation10 [shape = 's32[1]{0}', space=sflag, size = 0x4, scoped, tag = 'scoped memory for tpu_custom_call.1']
    #allocation11 [shape = 'u8[512]{0}', space=vmem, size = 0x400, scoped, tag = 'output window, operand 0, single buffered']
    %16 = vsyncpa [#allocation4], 0
    %17 = vsyncpa [#allocation7], 0
    %18 = vsyncpa [#allocation10], 0
    %19 = vsyncpa [#allocation5], 0
    // Predicated region
    $region2: #{tpu_custom_call.1} parent=1 // pred_check
      _
    $region3: #{tpu_custom_call.1} parent=1 // pred_check_branch
      %21 = sbr.rel (0) target = $region5
    $region4: #{tpu_custom_call.1} parent=1 // pred_region
      %s23 = ssub.s32 128, 128
      %24 = vsyncadd [#allocation4], %s23
      %s26 = sshll.u32 [#allocation3], 4
      %s27 = int_to_ptr.vmem [resolvable:$true] %s26
      %29 = dma.hbm_to_vmem [thread:$0]  %s0, 128, %s27, [#allocation4]
    $region5: #{tpu_custom_call.1} parent=1 // pred_fallthru
      _
    // Predicated region
    $region6: #{tpu_custom_call.1} parent=1 // pred_check
      _
    $region7: #{tpu_custom_call.1} parent=1 // pred_check_branch
      %31 = sbr.rel (0) target = $region9
    $region8: #{tpu_custom_call.1} parent=1 // pred_region
      _
    $region9: #{tpu_custom_call.1} parent=1 // pred_fallthru
      _
    // Predicated region
    $region10: #{tpu_custom_call.1} parent=1 // pred_check
      _
    $region11: #{tpu_custom_call.1} parent=1 // pred_check_branch
      %33 = sbr.rel (0) target = $region13
    $region12: #{tpu_custom_call.1} parent=1 // pred_region
      _
    $region13: #{tpu_custom_call.1} parent=1 // pred_fallthru
      _
    // Predicated region
    $region14: #{tpu_custom_call.1} parent=1 // pred_check
      _
    $region15: #{tpu_custom_call.1} parent=1 // pred_check_branch
      %35 = sbr.rel (0) target = $region17
    $region16: #{tpu_custom_call.1} parent=1 // pred_region
      %s37 = ssub.s32 2048, 2048
      %38 = vsyncadd [#allocation7], %s37
      %s39 = sshll.u32 [#allocation6], 4
      %s40 = int_to_ptr.vmem [resolvable:$true] %s39
      %45 = dma.hbm_to_vmem [thread:$0]  %s3, 2048, %s40, [#allocation7], 128, 128, 8
    $region17: #{tpu_custom_call.1} parent=1 // pred_fallthru
      _
    // Predicated region
    $region18: #{tpu_custom_call.1} parent=1 // pred_check
      _
    $region19: #{tpu_custom_call.1} parent=1 // pred_check_branch
      %47 = sbr.rel (0) target = $region21
    $region20: #{tpu_custom_call.1} parent=1 // pred_region
      %s49 = ssub.s32 896, 896
      %50 = vsyncadd [#allocation7], %s49
      %s51 = sshll.u32 [#allocation8], 4
      %s52 = int_to_ptr.vmem [resolvable:$true] %s51
      %57 = dma.hbm_to_vmem [thread:$0]  %s4, 896, %s52, [#allocation7], 128, 128, 8
    $region21: #{tpu_custom_call.1} parent=1 // pred_fallthru
      _
    // Predicated region
    $region22: #{tpu_custom_call.1} parent=1 // pred_check
      _
    $region23: #{tpu_custom_call.1} parent=1 // pred_check_branch
      %59 = sbr.rel (0) target = $region25
    $region24: #{tpu_custom_call.1} parent=1 // pred_region
      _
    $region25: #{tpu_custom_call.1} parent=1 // pred_fallthru
      _
    // Predicated region
    $region26: #{tpu_custom_call.1} parent=1 // pred_check
      _
    $region27: #{tpu_custom_call.1} parent=1 // pred_check_branch
      %61 = sbr.rel (0) target = $region29
    $region28: #{tpu_custom_call.1} parent=1 // pred_region
      %s63 = ssub.s32 2048, 2048
      %64 = vsyncadd [#allocation10], %s63
      %s65 = sshll.u32 [#allocation9], 4
      %s66 = int_to_ptr.vmem [resolvable:$true] %s65
      %71 = dma.hbm_to_vmem [thread:$0]  %s6, 2048, %s66, [#allocation10], 128, 128, 8
    $region29: #{tpu_custom_call.1} parent=1 // pred_fallthru
      _
    // Predicated region
    $region30: #{tpu_custom_call.1} parent=1 // pred_check
      _
    $region31: #{tpu_custom_call.1} parent=1 // pred_check_branch
      %73 = sbr.rel (0) target = $region33
    $region32: #{tpu_custom_call.1} parent=1 // pred_region
      _
    $region33: #{tpu_custom_call.1} parent=1 // pred_fallthru
      _
    // Predicated region
    $region34: #{tpu_custom_call.1} parent=1 // pred_check
      _
    $region35: #{tpu_custom_call.1} parent=1 // pred_check_branch
      %75 = sbr.rel (0) target = $region37
    $region36: #{tpu_custom_call.1} parent=1 // pred_region
      _
    $region37: #{tpu_custom_call.1} parent=1 // pred_fallthru
      _
    // Predicated region
    $region38: #{tpu_custom_call.1} parent=1 // pred_check
      _
    $region39: #{tpu_custom_call.1} parent=1 // pred_check_branch
      %77 = sbr.rel (0) target = $region41
    $region40: #{tpu_custom_call.1} parent=1 // pred_region
      _
    $region41: #{tpu_custom_call.1} parent=1 // pred_fallthru
      _
    // Predicated region
    $region42: #{tpu_custom_call.1} parent=1 // pred_check
      _
    $region43: #{tpu_custom_call.1} parent=1 // pred_check_branch
      %79 = sbr.rel (0) target = $region45
    $region44: #{tpu_custom_call.1} parent=1 // pred_region
      %80 = dma.done [#allocation4], 128
    $region45: #{tpu_custom_call.1} parent=1 // pred_fallthru
      _
    // Predicated region
    $region46: #{tpu_custom_call.1} parent=1 // pred_check
      _
    $region47: #{tpu_custom_call.1} parent=1 // pred_check_branch
      %82 = sbr.rel (0) target = $region49
    $region48: #{tpu_custom_call.1} parent=1 // pred_region
      %83 = dma.done [#allocation7], 2048
    $region49: #{tpu_custom_call.1} parent=1 // pred_fallthru
      _
    // Predicated region
    $region50: #{tpu_custom_call.1} parent=1 // pred_check
      _
    $region51: #{tpu_custom_call.1} parent=1 // pred_check_branch
      %85 = sbr.rel (0) target = $region53
    $region52: #{tpu_custom_call.1} parent=1 // pred_region
      %86 = dma.done [#allocation7], 896
    $region53: #{tpu_custom_call.1} parent=1 // pred_fallthru
      _
    // Predicated region
    $region54: #{tpu_custom_call.1} parent=1 // pred_check
      _
    $region55: #{tpu_custom_call.1} parent=1 // pred_check_branch
      %88 = sbr.rel (0) target = $region57
    $region56: #{tpu_custom_call.1} parent=1 // pred_region
      %89 = dma.done [#allocation10], 2048
    $region57: #{tpu_custom_call.1} parent=1 // pred_fallthru
      _
    %v90 = vld [vmem:[#allocation3] sm:$0xff]
    %v91 = vlaneseq
    %v92 = vand.u32 %v91, 127
    %93 = vset.pattern.permute.xlu0 0
    %94 = vperm.xlu0 %93, %v90
    %v95 = vpop.permute.xlu0 %94
    %vm96 = vcmp.eq.s32.totalorder %v95, %v92
    %97 = vset.pattern.permute.xlu0 1
    %98 = vperm.xlu0 %97, %v90
    %v99 = vpop.permute.xlu0 %98
    %vm100 = vcmp.eq.s32.totalorder %v99, %v92
    %vm101 = vmor %vm96, %vm100
    %102 = vset.pattern.permute.xlu0 2
    %103 = vperm.xlu0 %102, %v90
    %v104 = vpop.permute.xlu0 %103
    %vm105 = vcmp.eq.s32.totalorder %v104, %v92
    %vm106 = vmor %vm101, %vm105
    %107 = vset.pattern.permute.xlu0 3
    %108 = vperm.xlu0 %107, %v90
    %v109 = vpop.permute.xlu0 %108
    %vm110 = vcmp.eq.s32.totalorder %v109, %v92
    %vm111 = vmor %vm106, %vm110
    %112 = vset.pattern.permute.xlu0 4
    %113 = vperm.xlu0 %112, %v90
    %v114 = vpop.permute.xlu0 %113
    %vm115 = vcmp.eq.s32.totalorder %v114, %v92
    %vm116 = vmor %vm111, %vm115
    %v117 = vsel %vm116, 1, 0
    %v118 = vcvt.s32.f32 %v117
    %v119 = vld [vmem:[#allocation6] sm:$0xff]
    %v120 = vld [vmem:[#allocation6 + $0x8] sm:$0xff]
    %v121 = vld [vmem:[#allocation6 + $0x10] sm:$0xff]
    %v122 = vld [vmem:[#allocation6 + $0x18] sm:$0xff]
    %v123 = vld [vmem:[#allocation6 + $0x20] sm:$0xff]
    %v124 = vld [vmem:[#allocation6 + $0x28] sm:$0xff]
    %v125 = vld [vmem:[#allocation6 + $0x30] sm:$0xff]
    %v126 = vld [vmem:[#allocation6 + $0x38] sm:$0xff]
    %v127 = vld [vmem:[#allocation6 + $0x40] sm:$0xff]
    %v128 = vld [vmem:[#allocation6 + $0x48] sm:$0xff]
    %v129 = vld [vmem:[#allocation6 + $0x50] sm:$0xff]
    %v130 = vld [vmem:[#allocation6 + $0x58] sm:$0xff]
    %v131 = vld [vmem:[#allocation6 + $0x60] sm:$0xff]
    %v132 = vld [vmem:[#allocation6 + $0x68] sm:$0xff]
    %v133 = vld [vmem:[#allocation6 + $0x70] sm:$0xff]
    %v134 = vld [vmem:[#allocation6 + $0x78] sm:$0xff]
    %v135 = vld [vmem:[%s2] sm:$0x1]
    %v136 = vld [vmem:[%s1] sm:$0x1]
    %137 = vset.pattern.permute.xlu0 5
    %138 = vperm.xlu0 %137, %v90
    %v139 = vpop.permute.xlu0 %138
    %v141 = vlaneseq
    %v142 = vshrl.u32 %v141, 7
    %v143 = vsub.s32 0, %v142
    %v144 = vrot.slane %v136, %v143
    %v145 = vmul.f32 %v139, %v144
    %v147 = vlaneseq
    %v148 = vshrl.u32 %v147, 7
    %v149 = vsub.s32 0, %v148
    %v150 = vrot.slane %v135, %v149
    %v152 = vadd.f32 %v150, %v145
    %v153 = vld [vmem:[%s1 + $0x1] sm:$0x1]
    %154 = vset.pattern.permute.xlu0 6
    %155 = vperm.xlu0 %154, %v90
    %v156 = vpop.permute.xlu0 %155
    %v158 = vlaneseq
    %v159 = vshrl.u32 %v158, 7
    %v160 = vsub.s32 0, %v159
    %v161 = vrot.slane %v153, %v160
    %v162 = vmul.f32 %v156, %v161
    %v163 = vadd.f32 %v152, %v162
    %v164 = vmax.f32 %v163, 0.0
    %v165 = vld [vmem:[#allocation8] sm:$0xff]
    %v166 = vld [vmem:[#allocation8 + $0x8] sm:$0xff]
    %v167 = vld [vmem:[#allocation8 + $0x10] sm:$0xff]
    %v168 = vld [vmem:[#allocation8 + $0x18] sm:$0xff]
    %v169 = vld [vmem:[#allocation8 + $0x20] sm:$0xff]
    %v170 = vld [vmem:[#allocation8 + $0x28] sm:$0xff]
    %v171 = vld [vmem:[#allocation8 + $0x30] sm:$0x3]
    %vm172 = vcmask 408576
    %v174 = vsel %vm172, %v164, 0
    %vm176 = vcmask 1041408
    %v178 = vsel %vm176, %v171, 0
    %180 = vmatprep.subr.mxu0 0.0
    %181 = vmatpush1.msra.mxu0 %v165
    %182 = vmatprep.subr.mxu0 0.0
    %183 = vmatpush1.msra.mxu0 %v166
    %184 = vmatprep.subr.mxu0 0.0
    %185 = vmatpush1.msra.mxu0 %v167
    %186 = vmatprep.subr.mxu0 0.0
    %187 = vmatpush1.msra.mxu0 %v168
    %188 = vmatprep.subr.mxu0 0.0
    %189 = vmatpush1.msra.mxu0 %v169
    %190 = vmatprep.subr.mxu0 0.0
    %191 = vmatpush1.msra.mxu0 %v170
    %192 = vmatprep.subr.mxu0 0.0
    %193 = vmatpush1.msra.mxu0 %v178
    %194 = vmatprep.subr.mxu0 0.0
    %195 = vmatpush1.msra.mxu0 0.0
    %196 = vmatprep.subr.mxu0 0.0
    %197 = vmatpush1.msra.mxu0 0.0
    %198 = vmatprep.subr.mxu0 0.0
    %199 = vmatpush1.msra.mxu0 0.0
    %200 = vmatprep.subr.mxu0 0.0
    %201 = vmatpush1.msra.mxu0 0.0
    %202 = vmatprep.subr.mxu0 0.0
    %203 = vmatpush1.msra.mxu0 0.0
    %204 = vmatprep.subr.mxu0 0.0
    %205 = vmatpush1.msra.mxu0 0.0
    %206 = vmatprep.subr.mxu0 0.0
    %207 = vmatpush1.msra.mxu0 0.0
    %208 = vmatprep.subr.mxu0 0.0
    %209 = vmatpush1.msra.mxu0 0.0
    %210 = vmatprep.subr.mxu0 0.0
    %211 = vmatpush1.msra.mxu0 0.0
    %212 = vmatprep.subr.mxu0 0.0
    %213 = vmatpush1.msra.mxu0 0.0
    %214 = vmatprep.subr.mxu0 0.0
    %215 = vmatpush1.msra.mxu0 0.0
    %216 = vmatprep.subr.mxu0 0.0
    %217 = vmatpush1.msra.mxu0 0.0
    %218 = vmatprep.subr.mxu0 0.0
    %219 = vmatpush1.msra.mxu0 0.0
    %220 = vmatprep.subr.mxu0 0.0
    %221 = vmatpush1.msra.mxu0 0.0
    %222 = vmatprep.subr.mxu0 0.0
    %223 = vmatpush1.msra.mxu0 0.0
    %224 = vmatprep.subr.mxu0 0.0
    %225 = vmatpush1.msra.mxu0 0.0
    %226 = vmatprep.subr.mxu0 0.0
    %227 = vmatpush1.msra.mxu0 0.0
    %228 = vmatprep.subr.mxu0 0.0
    %229 = vmatpush1.msra.mxu0 0.0
    %230 = vmatprep.subr.mxu0 0.0
    %231 = vmatpush1.msra.mxu0 0.0
    %232 = vmatprep.subr.mxu0 0.0
    %233 = vmatpush1.msra.mxu0 0.0
    %234 = vmatprep.subr.mxu0 0.0
    %235 = vmatpush1.msra.mxu0 0.0
    %236 = vmatprep.subr.mxu0 0.0
    %237 = vmatpush1.msra.mxu0 0.0
    %238 = vmatprep.subr.mxu0 0.0
    %239 = vmatpush1.msra.mxu0 0.0
    %240 = vmatprep.subr.mxu0 0.0
    %241 = vmatpush1.msra.mxu0 0.0
    %242 = vmatprep.subr.mxu0 0.0
    %243 = vmatpush1.msra.mxu0 0.0
    %244 = vmatprep.mubr.f32.mxu0 0.0
    %245 = vmatmul.mubr.f32.gmra.mrb[0].mxu0 %v174
    %v246 = vpop.f32.mrb[0].mxu0
    %v247 = vadd.f32 0.0, %v246
    %v248 = vpop.f32.mrb[0].mxu0
    %249 = vdwg.mxu0
    %250 = vmatprep.subr.mxu0 0.0
    %251 = vmatpush1.msra.mxu0 %v119
    %252 = vmatprep.subr.mxu0 0.0
    %253 = vmatpush1.msra.mxu0 %v120
    %254 = vmatprep.subr.mxu0 0.0
    %255 = vmatpush1.msra.mxu0 %v121
    %256 = vmatprep.subr.mxu0 0.0
    %257 = vmatpush1.msra.mxu0 %v122
    %258 = vmatprep.subr.mxu0 0.0
    %259 = vmatpush1.msra.mxu0 %v123
    %260 = vmatprep.subr.mxu0 0.0
    %261 = vmatpush1.msra.mxu0 %v124
    %262 = vmatprep.subr.mxu0 0.0
    %263 = vmatpush1.msra.mxu0 %v125
    %264 = vmatprep.subr.mxu0 0.0
    %265 = vmatpush1.msra.mxu0 %v126
    %266 = vmatprep.subr.mxu0 0.0
    %267 = vmatpush1.msra.mxu0 %v127
    %268 = vmatprep.subr.mxu0 0.0
    %269 = vmatpush1.msra.mxu0 %v128
    %270 = vmatprep.subr.mxu0 0.0
    %271 = vmatpush1.msra.mxu0 %v129
    %272 = vmatprep.subr.mxu0 0.0
    %273 = vmatpush1.msra.mxu0 %v130
    %274 = vmatprep.subr.mxu0 0.0
    %275 = vmatpush1.msra.mxu0 %v131
    %276 = vmatprep.subr.mxu0 0.0
    %277 = vmatpush1.msra.mxu0 %v132
    %278 = vmatprep.subr.mxu0 0.0
    %279 = vmatpush1.msra.mxu0 %v133
    %280 = vmatprep.subr.mxu0 0.0
    %281 = vmatpush1.msra.mxu0 %v134
    %282 = vmatprep.subr.mxu0 0.0
    %283 = vmatpush1.msra.mxu0 0.0
    %284 = vmatprep.subr.mxu0 0.0
    %285 = vmatpush1.msra.mxu0 0.0
    %286 = vmatprep.subr.mxu0 0.0
    %287 = vmatpush1.msra.mxu0 0.0
    %288 = vmatprep.subr.mxu0 0.0
    %289 = vmatpush1.msra.mxu0 0.0
    %290 = vmatprep.subr.mxu0 0.0
    %291 = vmatpush1.msra.mxu0 0.0
    %292 = vmatprep.subr.mxu0 0.0
    %293 = vmatpush1.msra.mxu0 0.0
    %294 = vmatprep.subr.mxu0 0.0
    %295 = vmatpush1.msra.mxu0 0.0
    %296 = vmatprep.subr.mxu0 0.0
    %297 = vmatpush1.msra.mxu0 0.0
    %298 = vmatprep.subr.mxu0 0.0
    %299 = vmatpush1.msra.mxu0 0.0
    %300 = vmatprep.subr.mxu0 0.0
    %301 = vmatpush1.msra.mxu0 0.0
    %302 = vmatprep.subr.mxu0 0.0
    %303 = vmatpush1.msra.mxu0 0.0
    %304 = vmatprep.subr.mxu0 0.0
    %305 = vmatpush1.msra.mxu0 0.0
    %306 = vmatprep.subr.mxu0 0.0
    %307 = vmatpush1.msra.mxu0 0.0
    %308 = vmatprep.subr.mxu0 0.0
    %309 = vmatpush1.msra.mxu0 0.0
    %310 = vmatprep.subr.mxu0 0.0
    %311 = vmatpush1.msra.mxu0 0.0
    %312 = vmatprep.subr.mxu0 0.0
    %313 = vmatpush1.msra.mxu0 0.0
    %314 = vmatprep.mubr.f32.mxu0 0.0
    %315 = vmatmul.mubr.f32.gmra.mrb[0].mxu0 %v118
    %v316 = vpop.f32.mrb[0].mxu0
    %v317 = vadd.f32 %v247, %v316
    %v318 = vpop.f32.mrb[0].mxu0
    %319 = vdwg.mxu0
    %v320 = vld [vmem:[%s5] sm:$0x1]
    %v322 = vlaneseq
    %v323 = vshrl.u32 %v322, 7
    %v324 = vsub.s32 0, %v323
    %v325 = vrot.slane %v320, %v324
    %v327 = vadd.f32 %v317, %v325
    %v328 = vmax.f32 %v327, 0.0
    %v329 = vld [vmem:[#allocation9] sm:$0xff]
    %v330 = vld [vmem:[#allocation9 + $0x8] sm:$0xff]
    %v331 = vld [vmem:[#allocation9 + $0x10] sm:$0xff]
    %v332 = vld [vmem:[#allocation9 + $0x18] sm:$0xff]
    %v333 = vld [vmem:[#allocation9 + $0x20] sm:$0xff]
    %v334 = vld [vmem:[#allocation9 + $0x28] sm:$0xff]
    %v335 = vld [vmem:[#allocation9 + $0x30] sm:$0xff]
    %v336 = vld [vmem:[#allocation9 + $0x38] sm:$0xff]
    %v337 = vld [vmem:[#allocation9 + $0x40] sm:$0xff]
    %v338 = vld [vmem:[#allocation9 + $0x48] sm:$0xff]
    %v339 = vld [vmem:[#allocation9 + $0x50] sm:$0xff]
    %v340 = vld [vmem:[#allocation9 + $0x58] sm:$0xff]
    %v341 = vld [vmem:[#allocation9 + $0x60] sm:$0xff]
    %v342 = vld [vmem:[#allocation9 + $0x68] sm:$0xff]
    %v343 = vld [vmem:[#allocation9 + $0x70] sm:$0xff]
    %v344 = vld [vmem:[#allocation9 + $0x78] sm:$0xff]
    %v345 = vld [vmem:[%s7] sm:$0x1]
    %v347 = vlaneseq
    %v348 = vshrl.u32 %v347, 7
    %v349 = vsub.s32 0, %v348
    %v350 = vrot.slane %v345, %v349
    %352 = vmatprep.subr.mxu0 0.0
    %353 = vmatpush1.msra.mxu0 %v329
    %354 = vmatprep.subr.mxu0 0.0
    %355 = vmatpush1.msra.mxu0 %v330
    %356 = vmatprep.subr.mxu0 0.0
    %357 = vmatpush1.msra.mxu0 %v331
    %358 = vmatprep.subr.mxu0 0.0
    %359 = vmatpush1.msra.mxu0 %v332
    %360 = vmatprep.subr.mxu0 0.0
    %361 = vmatpush1.msra.mxu0 %v333
    %362 = vmatprep.subr.mxu0 0.0
    %363 = vmatpush1.msra.mxu0 %v334
    %364 = vmatprep.subr.mxu0 0.0
    %365 = vmatpush1.msra.mxu0 %v335
    %366 = vmatprep.subr.mxu0 0.0
    %367 = vmatpush1.msra.mxu0 %v336
    %368 = vmatprep.subr.mxu0 0.0
    %369 = vmatpush1.msra.mxu0 %v337
    %370 = vmatprep.subr.mxu0 0.0
    %371 = vmatpush1.msra.mxu0 %v338
    %372 = vmatprep.subr.mxu0 0.0
    %373 = vmatpush1.msra.mxu0 %v339
    %374 = vmatprep.subr.mxu0 0.0
    %375 = vmatpush1.msra.mxu0 %v340
    %376 = vmatprep.subr.mxu0 0.0
    %377 = vmatpush1.msra.mxu0 %v341
    %378 = vmatprep.subr.mxu0 0.0
    %379 = vmatpush1.msra.mxu0 %v342
    %380 = vmatprep.subr.mxu0 0.0
    %381 = vmatpush1.msra.mxu0 %v343
    %382 = vmatprep.subr.mxu0 0.0
    %383 = vmatpush1.msra.mxu0 %v344
    %384 = vmatprep.subr.mxu0 0.0
    %385 = vmatpush1.msra.mxu0 0.0
    %386 = vmatprep.subr.mxu0 0.0
    %387 = vmatpush1.msra.mxu0 0.0
    %388 = vmatprep.subr.mxu0 0.0
    %389 = vmatpush1.msra.mxu0 0.0
    %390 = vmatprep.subr.mxu0 0.0
    %391 = vmatpush1.msra.mxu0 0.0
    %392 = vmatprep.subr.mxu0 0.0
    %393 = vmatpush1.msra.mxu0 0.0
    %394 = vmatprep.subr.mxu0 0.0
    %395 = vmatpush1.msra.mxu0 0.0
    %396 = vmatprep.subr.mxu0 0.0
    %397 = vmatpush1.msra.mxu0 0.0
    %398 = vmatprep.subr.mxu0 0.0
    %399 = vmatpush1.msra.mxu0 0.0
    %400 = vmatprep.subr.mxu0 0.0
    %401 = vmatpush1.msra.mxu0 0.0
    %402 = vmatprep.subr.mxu0 0.0
    %403 = vmatpush1.msra.mxu0 0.0
    %404 = vmatprep.subr.mxu0 0.0
    %405 = vmatpush1.msra.mxu0 0.0
    %406 = vmatprep.subr.mxu0 0.0
    %407 = vmatpush1.msra.mxu0 0.0
    %408 = vmatprep.subr.mxu0 0.0
    %409 = vmatpush1.msra.mxu0 0.0
    %410 = vmatprep.subr.mxu0 0.0
    %411 = vmatpush1.msra.mxu0 0.0
    %412 = vmatprep.subr.mxu0 0.0
    %413 = vmatpush1.msra.mxu0 0.0
    %414 = vmatprep.subr.mxu0 0.0
    %415 = vmatpush1.msra.mxu0 0.0
    %416 = vmatprep.mubr.f32.mxu0 0.0
    %417 = vmatmul.mubr.f32.gmra.mrb[0].mxu0 %v328
    %v418 = vpop.f32.mrb[0].mxu0
    %v419 = vadd.f32 %v350, %v418
    %v420 = vpop.f32.mrb[0].mxu0
    %421 = vdwg.mxu0
    %v422 = vmax.f32 %v419, 0.0
    %v423 = vld [vmem:[%s8] sm:$0x1]
    %s424 = sld [smem:[#allocation2]]
    %v425 = vstv %s424
    %426 = vmatprep.subr.mxu0 0.0
    %427 = vmatpush1.xpose.msra.mxu0 %v422
    %428 = vmatprep.subr.mxu0 0.0
    %429 = vmatpush1.xpose.msra.mxu0 0.0
    %430 = vmatprep.subr.mxu0 0.0
    %431 = vmatpush1.xpose.msra.mxu0 0.0
    %432 = vmatprep.subr.mxu0 0.0
    %433 = vmatpush1.xpose.msra.mxu0 0.0
    %434 = vmatprep.subr.mxu0 0.0
    %435 = vmatpush1.xpose.msra.mxu0 0.0
    %436 = vmatprep.subr.mxu0 0.0
    %437 = vmatpush1.xpose.msra.mxu0 0.0
    %438 = vmatprep.subr.mxu0 0.0
    %439 = vmatpush1.xpose.msra.mxu0 0.0
    %440 = vmatprep.subr.mxu0 0.0
    %441 = vmatpush1.xpose.msra.mxu0 0.0
    %442 = vmatprep.subr.mxu0 0.0
    %443 = vmatpush1.xpose.msra.mxu0 0.0
    %444 = vmatprep.subr.mxu0 0.0
    %445 = vmatpush1.xpose.msra.mxu0 0.0
    %446 = vmatprep.subr.mxu0 0.0
    %447 = vmatpush1.xpose.msra.mxu0 0.0
    %448 = vmatprep.subr.mxu0 0.0
    %449 = vmatpush1.xpose.msra.mxu0 0.0
    %450 = vmatprep.subr.mxu0 0.0
    %451 = vmatpush1.xpose.msra.mxu0 0.0
    %452 = vmatprep.subr.mxu0 0.0
    %453 = vmatpush1.xpose.msra.mxu0 0.0
    %454 = vmatprep.subr.mxu0 0.0
    %455 = vmatpush1.xpose.msra.mxu0 0.0
    %456 = vmatprep.subr.mxu0 0.0
    %457 = vmatpush1.xpose.msra.mxu0 0.0
    %458 = vmatprep.subr.mxu0 0.0
    %459 = vmatpush1.xpose.msra.mxu0 0.0
    %460 = vmatprep.subr.mxu0 0.0
    %461 = vmatpush1.xpose.msra.mxu0 0.0
    %462 = vmatprep.subr.mxu0 0.0
    %463 = vmatpush1.xpose.msra.mxu0 0.0
    %464 = vmatprep.subr.mxu0 0.0
    %465 = vmatpush1.xpose.msra.mxu0 0.0
    %466 = vmatprep.subr.mxu0 0.0
    %467 = vmatpush1.xpose.msra.mxu0 0.0
    %468 = vmatprep.subr.mxu0 0.0
    %469 = vmatpush1.xpose.msra.mxu0 0.0
    %470 = vmatprep.subr.mxu0 0.0
    %471 = vmatpush1.xpose.msra.mxu0 0.0
    %472 = vmatprep.subr.mxu0 0.0
    %473 = vmatpush1.xpose.msra.mxu0 0.0
    %474 = vmatprep.subr.mxu0 0.0
    %475 = vmatpush1.xpose.msra.mxu0 0.0
    %476 = vmatprep.subr.mxu0 0.0
    %477 = vmatpush1.xpose.msra.mxu0 0.0
    %478 = vmatprep.subr.mxu0 0.0
    %479 = vmatpush1.xpose.msra.mxu0 0.0
    %480 = vmatprep.subr.mxu0 0.0
    %481 = vmatpush1.xpose.msra.mxu0 0.0
    %482 = vmatprep.subr.mxu0 0.0
    %483 = vmatpush1.xpose.msra.mxu0 0.0
    %484 = vmatprep.subr.mxu0 0.0
    %485 = vmatpush1.xpose.msra.mxu0 0.0
    %486 = vmatprep.subr.mxu0 0.0
    %487 = vmatpush1.xpose.msra.mxu0 0.0
    %488 = vmatprep.subr.mxu0 0.0
    %489 = vmatpush1.xpose.msra.mxu0 0.0
    %490 = vmatprep.mubr.f32.mxu0 0.0
    %491 = vmatmul.mubr.f32.gmra.mrb[0].mxu0 %v423
    %v492 = vpop.f32.mrb[0].mxu0
    %v493 = vadd.f32 %v425, %v492
    %v494 = vpop.f32.mrb[0].mxu0
    %495 = vdwg.mxu0
    %vm496 = vcmask 57344
    %497 = vst.msk [vmem:[#allocation11] sm:$0x1] %vm496, %v493
    // Predicated region
    $region58: #{tpu_custom_call.1} parent=1 // pred_check
      _
    $region59: #{tpu_custom_call.1} parent=1 // pred_check_branch
      %499 = sbr.rel (0) target = $region61
    $region60: #{tpu_custom_call.1} parent=1 // pred_region
      %s501 = ssub.s32 16, 16
      %502 = vsyncadd [#allocation5], %s501
      %s504 = sshll.u32 [#allocation11], 4
      %s505 = int_to_ptr.vmem [resolvable:$true] %s504
      %507 = dma.vmem_to_hbm [thread:$0]  %s505, 16, %s10, [#allocation5]
    $region61: #{tpu_custom_call.1} parent=1 // pred_fallthru
      _
    // Predicated region
    $region62: #{tpu_custom_call.1} parent=1 // pred_check
      _
    $region63: #{tpu_custom_call.1} parent=1 // pred_check_branch
      %509 = sbr.rel (0) target = $region65
    $region64: #{tpu_custom_call.1} parent=1 // pred_region
      %510 = dma.done [#allocation5], 16
    $region65: #{tpu_custom_call.1} parent=1 // pred_fallthru
      _
    %511 = vsyncpa [#allocation4], 1
    %512 = vsyncpa [#allocation7], 1
    %513 = vsyncpa [#allocation10], 1
    %514 = vsyncpa [#allocation5], 1

</llo_original>
